<compile_context>
chip_gen: v7x
topology: tpu7x:2x2x1
jax: 0.10.0
libtpu: 0.0.40
codegen_flags: <defaults>
</compile_context>

<pallas_src>
import functools
import math

import jax
import jax.numpy as jnp
from jax.experimental import pallas as pl
from jax.experimental.pallas import tpu as pltpu

_TARGET_BLOCK_BYTES = 2 << 20   # ~2 MiB per input per grid step
_LANE = 128
_SUBLANE = 8


def _ceil_to(x, m):
    return ((x + m - 1) // m) * m


# ----------------------------------------------------------------------------
# mode == 'both': lane-dense (B*T*F, X*Y*Z) view, pressure/saturation split by
# an in-kernel row mask (row % F < F//2), applied once at finalize.
# ----------------------------------------------------------------------------
def _sse_both_kernel(pred_ref, true_ref, out_ref, acc_ref, *, n_rows, fields):
    i = pl.program_id(0)
    nsteps = pl.num_programs(0)
    tile_rows, s = acc_ref.shape

    @pl.when(i == 0)
    def _():
        acc_ref[...] = jnp.zeros_like(acc_ref)

    d = pred_ref[...].astype(jnp.float32) - true_ref[...].astype(jnp.float32)
    sq = d * d

    @pl.when(i < nsteps - 1)
    def _():
        acc_ref[...] += sq                    # pure VPU accumulate, no reduce

    @pl.when(i == nsteps - 1)
    def _():
        row = jax.lax.broadcasted_iota(jnp.int32, (tile_rows, s), 0)
        valid = (row + i * tile_rows) < n_rows          # mask grid overhang rows
        acc = acc_ref[...] + jnp.where(valid, sq, 0.0)
        # tile_rows % fields == 0 (by construction), so the local row index
        # determines the field: first half of each field-group is pressure.
        is_p = (row % fields) < (fields // 2)
        sum_p = jnp.sum(jnp.where(is_p, acc, 0.0))
        sum_all = jnp.sum(acc)
        out_ref[0] = sum_p
        out_ref[1] = sum_all - sum_p


def _plan_both(n_rows, s, fields, in_itemsize):
    s_pad = _ceil_to(s, _LANE)
    acc_row_bytes = s_pad * 4
    base = (8 * fields) // math.gcd(8, fields)          # lcm(8, fields)
    cand = (_TARGET_BLOCK_BYTES // acc_row_bytes) // base * base
    tile_rows = max(base, cand)
    if tile_rows >= n_rows:
        tile_rows = n_rows                              # full dim: always legal
    rows_pad = _ceil_to(tile_rows, _SUBLANE)
    in_block = rows_pad * s_pad * in_itemsize
    acc_block = rows_pad * s_pad * 4
    need = 2 * 2 * in_block + acc_block                 # 2 inputs, double-buffered
    vmem_limit = int(min(max(need + (4 << 20), 16 << 20), 64 << 20))
    return tile_rows, vmem_limit


def _sse_both(preds, trues):
    B, T, F, X, Y, Z = preds.shape
    n_rows = B * T * F
    s = X * Y * Z
    p2 = preds.reshape(n_rows, s)           # contiguous reshape: no HBM copy
    t2 = trues.reshape(n_rows, s)
    itemsize = jnp.dtype(preds.dtype).itemsize
    tile_rows, vmem_limit = _plan_both(n_rows, s, F, itemsize)
    grid = (pl.cdiv(n_rows, tile_rows),)
    spec = pl.BlockSpec((tile_rows, s), lambda i: (i, 0))
    kernel = functools.partial(_sse_both_kernel, n_rows=n_rows, fields=F)
    return pl.pallas_call(
        kernel,
        out_shape=jax.ShapeDtypeStruct((2,), jnp.float32),
        grid_spec=pltpu.PrefetchScalarGridSpec(
            num_scalar_prefetch=0,
            grid=grid,
            in_specs=[spec, spec],
            out_specs=pl.BlockSpec(memory_space=pltpu.MemorySpace.SMEM),
            scratch_shapes=[pltpu.VMEM((tile_rows, s), jnp.float32)],
        ),
        compiler_params=pltpu.CompilerParams(
            dimension_semantics=("arbitrary",),
            vmem_limit_bytes=vmem_limit,
        ),
    )(p2, t2)


# ----------------------------------------------------------------------------
# mode == 'pressure'/'saturation': only the needed half is streamed from HBM by
# selecting it along the field axis in the BlockSpec index_map.
# ----------------------------------------------------------------------------
def _sse_half_kernel(pred_ref, true_ref, out_ref, acc_ref):
    i = pl.program_id(0)

    @pl.when(i == 0)
    def _():
        acc_ref[...] = jnp.zeros_like(acc_ref)

    d = pred_ref[...].astype(jnp.float32) - true_ref[...].astype(jnp.float32)
    acc_ref[...] += d * d                     # pure VPU accumulate

    @pl.when(i == pl.num_programs(0) - 1)
    def _():
        out_ref[0] = jnp.sum(acc_ref[...])    # single cross-lane reduce


def _plan_half(bt, fh, x, y, z, in_itemsize):
    # VMEM footprint per leading row, accounting for (sublane, lane) padding.
    row_elems = fh * x * _ceil_to(y, _SUBLANE) * _ceil_to(z, _LANE)
    acc_row_bytes = row_elems * 4
    tile_n = 1
    for d in range(1, bt + 1):                # exact divisor -> no overhang/mask
        if bt % d == 0 and d * acc_row_bytes <= _TARGET_BLOCK_BYTES:
            tile_n = d
    in_block = tile_n * row_elems * in_itemsize
    acc_block = tile_n * row_elems * 4
    need = 2 * 2 * in_block + acc_block
    vmem_limit = int(min(max(need + (4 << 20), 16 << 20), 64 << 20))
    return tile_n, vmem_limit


def _sse_half(preds, trues, half_idx):
    B, T, F, X, Y, Z = preds.shape
    fh = F // 2
    bt = B * T
    p5 = preds.reshape(bt, F, X, Y, Z)        # contiguous reshape: no HBM copy
    t5 = trues.reshape(bt, F, X, Y, Z)
    itemsize = jnp.dtype(preds.dtype).itemsize
    tile_n, vmem_limit = _plan_half(bt, fh, X, Y, Z, itemsize)
    grid = (bt // tile_n,)
    spec = pl.BlockSpec((tile_n, fh, X, Y, Z),
                        lambda i: (i, half_idx, 0, 0, 0))
    return pl.pallas_call(
        _sse_half_kernel,
        out_shape=jax.ShapeDtypeStruct((1,), jnp.float32),
        grid_spec=pltpu.PrefetchScalarGridSpec(
            num_scalar_prefetch=0,
            grid=grid,
            in_specs=[spec, spec],
            out_specs=pl.BlockSpec(memory_space=pltpu.MemorySpace.SMEM),
            scratch_shapes=[pltpu.VMEM((tile_n, fh, X, Y, Z), jnp.float32)],
        ),
        compiler_params=pltpu.CompilerParams(
            dimension_semantics=("arbitrary",),
            vmem_limit_bytes=vmem_limit,
        ),
    )(p5, t5)


# ----------------------------------------------------------------------------
# Public entry point: faithful to BaseMultiFieldLoss3D.forward with MSE loss_fn.
# ----------------------------------------------------------------------------
def multi_field_mse_loss_3d(preds, trues, mode="both", pseudo_3d=False):
    assert mode in ("both", "pressure", "saturation")
    assert preds.shape == trues.shape
    B, T, F, X, Y, Z = preds.shape
    # torch.chunk(x, 2, dim=2) with even F gives equal halves; require that.
    assert F % 2 == 0, "field dim must be even to chunk into pressure/saturation"
    del pseudo_3d  # reshape() is a pure re-layout: no effect on an elementwise-mean loss
    half_count = jnp.float32(B * T * (F // 2) * X * Y * Z)
    if mode == "both":
        sums = _sse_both(preds, trues)
        return (sums[0] + sums[1]) / (2.0 * half_count)
    half_idx = 0 if mode == "pressure" else 1
    s = _sse_half(preds, trues, half_idx)
    return s[0] / half_count


def _reference(preds, trues, mode="both"):
    F = preds.shape[2]
    p_p, s_p = preds[:, :, : F // 2], preds[:, :, F // 2:]
    p_t, s_t = trues[:, :, : F // 2], trues[:, :, F // 2:]
    losses = []
    if mode in ("both", "pressure"):
        losses.append(jnp.mean((p_p - p_t) ** 2))
    if mode in ("both", "saturation"):
        losses.append(jnp.mean((s_p - s_t) ** 2))
    return sum(losses) / len(losses)


if __name__ == "__main__":
    # Small shapes consistent with the module: (B, T, F, X, Y, Z)
    B, T, F, X, Y, Z = 2, 3, 4, 8, 8, 4
    key = jax.random.PRNGKey(0)
    k1, k2 = jax.random.split(key)
    preds = jax.random.normal(k1, (B, T, F, X, Y, Z), dtype=jnp.float32)
    trues = jax.random.normal(k2, (B, T, F, X, Y, Z), dtype=jnp.float32)

    for mode in ("both", "pressure", "saturation"):
        out = jax.block_until_ready(multi_field_mse_loss_3d(preds, trues, mode=mode))
        ref = _reference(preds, trues, mode=mode)
        assert jnp.allclose(out, ref, rtol=1e-5, atol=1e-6), (mode, out, ref)

    print("KERNEL_OK")
</pallas_src>

<mosaic_0001>
module attributes {stable_mosaic.version = 11 : i64} {
  func.func @_sse_both_kernel(%arg0: i32, %arg1: memref<24x256xf32, #tpu.memory_space<vmem>>, %arg2: memref<24x256xf32, #tpu.memory_space<vmem>>, %arg3: memref<2xf32, #tpu.memory_space<smem>>, %arg4: memref<24x256xf32, #tpu.memory_space<vmem>>) attributes {dimension_semantics = [#tpu.dimension_semantics<arbitrary>], iteration_bounds = array<i64: 1>, scalar_prefetch = 0 : i64, scratch_operands = 1 : i64, tpu.core_type = #tpu.core_type<tc>, window_params = [{transform_indices = @transform_0, window_bounds = array<i64: 24, 256>}, {transform_indices = @transform_1, window_bounds = array<i64: 24, 256>}, {transform_indices = @transform_2, window_bounds = array<i64: 2>}]} {
    %c0_i32 = arith.constant 0 : i32
    %0 = arith.cmpi eq, %arg0, %c0_i32 : i32
    %1 = arith.extui %0 : i1 to i32
    %c0_i32_0 = arith.constant 0 : i32
    %2 = arith.cmpi ne, %1, %c0_i32_0 : i32
    scf.if %2 {
      %cst = arith.constant 0.000000e+00 : f32
      %13 = vector.broadcast %cst : f32 to vector<24x256xf32>
      %c0_8 = arith.constant 0 : index
      %c0_9 = arith.constant 0 : index
      %14 = vector.load %arg4[%c0_8, %c0_9] : memref<24x256xf32, #tpu.memory_space<vmem>>, vector<24x256xf32>
      tpu.vector_store %arg4[%c0_8, %c0_9], %13 {strides = array<i32>} : memref<24x256xf32, #tpu.memory_space<vmem>>, vector<24x256xf32>,
    } else {
    }
    %c0 = arith.constant 0 : index
    %c0_1 = arith.constant 0 : index
    %3 = vector.load %arg1[%c0, %c0_1] : memref<24x256xf32, #tpu.memory_space<vmem>>, vector<24x256xf32>
    %c0_2 = arith.constant 0 : index
    %c0_3 = arith.constant 0 : index
    %4 = vector.load %arg2[%c0_2, %c0_3] : memref<24x256xf32, #tpu.memory_space<vmem>>, vector<24x256xf32>
    %5 = arith.subf %3, %4 : vector<24x256xf32>
    %6 = arith.mulf %5, %5 : vector<24x256xf32>
    %c0_i32_4 = arith.constant 0 : i32
    %7 = arith.cmpi slt, %arg0, %c0_i32_4 : i32
    %8 = arith.extui %7 : i1 to i32
    %c0_i32_5 = arith.constant 0 : i32
    %9 = arith.cmpi ne, %8, %c0_i32_5 : i32
    scf.if %9 {
      %c0_8 = arith.constant 0 : index
      %c0_9 = arith.constant 0 : index
      %13 = vector.load %arg4[%c0_8, %c0_9] : memref<24x256xf32, #tpu.memory_space<vmem>>, vector<24x256xf32>
      %14 = arith.addf %13, %6 : vector<24x256xf32>
      %c0_10 = arith.constant 0 : index
      %c0_11 = arith.constant 0 : index
      %15 = vector.load %arg4[%c0_10, %c0_11] : memref<24x256xf32, #tpu.memory_space<vmem>>, vector<24x256xf32>
      tpu.vector_store %arg4[%c0_10, %c0_11], %14 {strides = array<i32>} : memref<24x256xf32, #tpu.memory_space<vmem>>, vector<24x256xf32>,
    } else {
    }
    %c0_i32_6 = arith.constant 0 : i32
    %10 = arith.cmpi eq, %arg0, %c0_i32_6 : i32
    %11 = arith.extui %10 : i1 to i32
    %c0_i32_7 = arith.constant 0 : i32
    %12 = arith.cmpi ne, %11, %c0_i32_7 : i32
    scf.if %12 {
      %13 = tpu.iota {dimensions = array<i32: 0>} : vector<24x256xi32>
      %c24_i32 = arith.constant 24 : i32
      %14 = arith.muli %arg0, %c24_i32 : i32
      %15 = vector.broadcast %14 : i32 to vector<24x256xi32>
      %16 = arith.addi %13, %15 : vector<24x256xi32>
      %c24_i32_8 = arith.constant 24 : i32
      %17 = vector.broadcast %c24_i32_8 : i32 to vector<24x256xi32>
      %18 = arith.cmpi slt, %16, %17 : vector<24x256xi32>
      %c0_9 = arith.constant 0 : index
      %c0_10 = arith.constant 0 : index
      %19 = vector.load %arg4[%c0_9, %c0_10] : memref<24x256xf32, #tpu.memory_space<vmem>>, vector<24x256xf32>
      %cst = arith.constant 0.000000e+00 : f32
      %20 = vector.broadcast %cst : f32 to vector<24x256xf32>
      %21 = arith.select %18, %6, %20 : vector<24x256xi1>, vector<24x256xf32>
      %22 = arith.addf %19, %21 : vector<24x256xf32>
      %c4_i32 = arith.constant 4 : i32
      %c0_i32_11 = arith.constant 0 : i32
      %23 = arith.cmpi eq, %c4_i32, %c0_i32_11 : i32
      %c1_i32 = arith.constant 1 : i32
      %24 = arith.select %23, %c1_i32, %c4_i32 : i32
      %25 = vector.broadcast %24 : i32 to vector<24x256xi32>
      %26 = arith.remsi %13, %25 : vector<24x256xi32>
      %c0_i32_12 = arith.constant 0 : i32
      %27 = vector.broadcast %c0_i32_12 : i32 to vector<24x256xi32>
      %28 = arith.cmpi ne, %26, %27 : vector<24x256xi32>
      %c0_i32_13 = arith.constant 0 : i32
      %29 = vector.broadcast %c0_i32_13 : i32 to vector<24x256xi32>
      %30 = arith.cmpi slt, %26, %29 : vector<24x256xi32>
      %c0_i32_14 = arith.constant 0 : i32
      %31 = arith.cmpi slt, %24, %c0_i32_14 : i32
      %32 = vector.broadcast %31 : i1 to vector<24x256xi1>
      %33 = vector.broadcast %32 : vector<24x256xi1> to vector<24x256xi1>
      %34 = arith.xori %30, %33 : vector<24x256xi1>
      %35 = arith.andi %34, %28 : vector<24x256xi1>
      %36 = vector.broadcast %24 : i32 to vector<24x256xi32>
      %37 = arith.addi %26, %36 : vector<24x256xi32>
      %38 = arith.select %35, %37, %26 : vector<24x256xi1>, vector<24x256xi32>
      %c2_i32 = arith.constant 2 : i32
      %39 = vector.broadcast %c2_i32 : i32 to vector<24x256xi32>
      %40 = arith.cmpi slt, %38, %39 : vector<24x256xi32>
      %cst_15 = arith.constant 0.000000e+00 : f32
      %41 = vector.broadcast %cst_15 : f32 to vector<24x256xf32>
      %42 = arith.select %40, %22, %41 : vector<24x256xi1>, vector<24x256xf32>
      %43 = vector.shape_cast %42 : vector<24x256xf32> to vector<1x24x256xf32>
      %cst_16 = arith.constant dense<0.000000e+00> : vector<1xf32>
      %44 = vector.multi_reduction <add>, %43, %cst_16 [1, 2] : vector<1x24x256xf32> to vector<1xf32>
      %45 = vector.shape_cast %44 : vector<1xf32> to vector<1x1x1xf32>
      %46 = vector.extract %45[0, 0, 0] : f32 from vector<1x1x1xf32>
      %47 = vector.shape_cast %22 : vector<24x256xf32> to vector<1x24x256xf32>
      %cst_17 = arith.constant dense<0.000000e+00> : vector<1xf32>
      %48 = vector.multi_reduction <add>, %47, %cst_17 [1, 2] : vector<1x24x256xf32> to vector<1xf32>
      %49 = vector.shape_cast %48 : vector<1xf32> to vector<1x1x1xf32>
      %50 = vector.extract %49[0, 0, 0] : f32 from vector<1x1x1xf32>
      %c0_18 = arith.constant 0 : index
      %51 = memref.load %arg3[%c0_18] : memref<2xf32, #tpu.memory_space<smem>>
      memref.store %46, %arg3[%c0_18] : memref<2xf32, #tpu.memory_space<smem>>
      %52 = arith.subf %50, %46 : f32
      %c1 = arith.constant 1 : index
      %53 = memref.load %arg3[%c1] : memref<2xf32, #tpu.memory_space<smem>>
      memref.store %52, %arg3[%c1] : memref<2xf32, #tpu.memory_space<smem>>
    } else {
    }
    return
  }
  func.func @transform_0(%arg0: i32) -> (i32, i32) {
    %c0_i32 = arith.constant 0 : i32
    %c0_i32_0 = arith.constant 0 : i32
    return %arg0, %c0_i32 : i32, i32
  }
  func.func @transform_1(%arg0: i32) -> (i32, i32) {
    %c0_i32 = arith.constant 0 : i32
    %c0_i32_0 = arith.constant 0 : i32
    return %arg0, %c0_i32 : i32, i32
  }
  func.func @transform_2(%arg0: i32) -> i32 {
    %c0_i32 = arith.constant 0 : i32
    %c0_i32_0 = arith.constant 0 : i32
    return %c0_i32 : i32
  }
}

</mosaic_0001>

<llo_original>
// kernel: tpu_custom_call.1
$region0: #{tpu_custom_call.1}
  #allocation0 [shape = 'u32[]', space=smem, size = 0x4, offset = 0x4, fixed_abs, tag = 'smem constant byte address 0x4 - core index']
  #allocation1 [shape = 'u32[144,128]{1,0:T(1,128)}', space=vmem, size = 0x12000, scoped, tag = 'internal scratch']
  #allocation2 [shape = 'f32[24,256]{1,0:T(8,128)}', space=vmem, size = 0x6000, scoped, tag = 'scratch operand']
  %s0 = inlined_call_operand.hbm [shape: f32[24,256], index: 0, kind: input, shape index: {}]
  %s1 = inlined_call_operand.hbm [shape: f32[24,256], index: 1, kind: input, shape index: {}]
  %s2 = inlined_call_operand.hbm [shape: f32[2], index: 2, kind: output, shape index: {}]
  %s3 = sld [smem:[#allocation0]]
  $region38: #{tpu_custom_call.1} parent=0
    _
  %s5 = ssub.s32 1, %s3
  %s6 = scalar_select 0, %s5, %s3
  $region1: #{tpu_custom_call.1} parent=0
    #allocation3 [shape = 'u8[24576]{0}', space=vmem, size = 0x6000, scoped, tag = 'input window, operand 0, single buffered']
    #allocation4 [shape = 's32[1]{0}', space=sflag, size = 0x4, scoped, tag = 'scoped memory for tpu_custom_call.1']
    #allocation5 [shape = 's32[1]{0}', space=sflag, size = 0x4, scoped, tag = 'scoped memory for tpu_custom_call.1']
    #allocation6 [shape = 'u8[24576]{0}', space=vmem, size = 0x6000, scoped, tag = 'input window, operand 1, single buffered']
    #allocation7 [shape = 's32[1]{0}', space=sflag, size = 0x4, scoped, tag = 'scoped memory for tpu_custom_call.1']
    #allocation8 [shape = 'u8[512]{0}', space=smem, size = 0x200, scoped, tag = 'output window, operand 0, single buffered']
    %7 = vsyncpa [#allocation4], 0
    %8 = vsyncpa [#allocation7], 0
    %9 = vsyncpa [#allocation5], 0
    // Predicated region
    $region2: #{tpu_custom_call.1} parent=1 // pred_check
      _
    $region3: #{tpu_custom_call.1} parent=1 // pred_check_branch
      %11 = sbr.rel (0) target = $region5
    $region4: #{tpu_custom_call.1} parent=1 // pred_region
      %s13 = ssub.s32 768, 768
      %14 = vsyncadd [#allocation4], %s13
      %s15 = sshll.u32 [#allocation3], 4
      %s16 = int_to_ptr.vmem [resolvable:$true] %s15
      %21 = dma.hbm_to_vmem [thread:$0]  %s0, 768, %s16, [#allocation4], 256, 256, 16
    $region5: #{tpu_custom_call.1} parent=1 // pred_fallthru
      _
    // Predicated region
    $region6: #{tpu_custom_call.1} parent=1 // pred_check
      _
    $region7: #{tpu_custom_call.1} parent=1 // pred_check_branch
      %23 = sbr.rel (0) target = $region9
    $region8: #{tpu_custom_call.1} parent=1 // pred_region
      %s25 = ssub.s32 768, 768
      %26 = vsyncadd [#allocation7], %s25
      %s27 = sshll.u32 [#allocation6], 4
      %s28 = int_to_ptr.vmem [resolvable:$true] %s27
      %33 = dma.hbm_to_vmem [thread:$0]  %s1, 768, %s28, [#allocation7], 256, 256, 16
    $region9: #{tpu_custom_call.1} parent=1 // pred_fallthru
      _
    // Predicated region
    $region10: #{tpu_custom_call.1} parent=1 // pred_check
      _
    $region11: #{tpu_custom_call.1} parent=1 // pred_check_branch
      %35 = sbr.rel (0) target = $region13
    $region12: #{tpu_custom_call.1} parent=1 // pred_region
      %36 = dma.done [#allocation4], 768
    $region13: #{tpu_custom_call.1} parent=1 // pred_fallthru
      _
    // Predicated region
    $region14: #{tpu_custom_call.1} parent=1 // pred_check
      _
    $region15: #{tpu_custom_call.1} parent=1 // pred_check_branch
      %38 = sbr.rel (0) target = $region17
    $region16: #{tpu_custom_call.1} parent=1 // pred_region
      %39 = dma.done [#allocation7], 768
    $region17: #{tpu_custom_call.1} parent=1 // pred_fallthru
      _
    %p40 = scmp.eq.s32.totalorder 0, 0
    // Predicated region
    $region18: #{tpu_custom_call.1} parent=1 // pred_check
      %p41 = pneg %p40
    $region19: #{tpu_custom_call.1} parent=1 // pred_check_branch
      %43 = sbr.rel (%p41) target = $region21
    $region20: #{tpu_custom_call.1} parent=1 // pred_region
      %44 = vst [vmem:[#allocation2] sm:$0xff] 0.0
      %45 = vst [vmem:[#allocation2 + $0x8] sm:$0xff] 0.0
      %46 = vst [vmem:[#allocation2 + $0x10] sm:$0xff] 0.0
      %47 = vst [vmem:[#allocation2 + $0x18] sm:$0xff] 0.0
      %48 = vst [vmem:[#allocation2 + $0x20] sm:$0xff] 0.0
      %49 = vst [vmem:[#allocation2 + $0x28] sm:$0xff] 0.0
    $region21: #{tpu_custom_call.1} parent=1 // pred_fallthru
      _
    %v50 = vld [vmem:[#allocation3] sm:$0xff]
    %v51 = vld [vmem:[#allocation3 + $0x8] sm:$0xff]
    %v52 = vld [vmem:[#allocation3 + $0x10] sm:$0xff]
    %v53 = vld [vmem:[#allocation3 + $0x18] sm:$0xff]
    %v54 = vld [vmem:[#allocation3 + $0x20] sm:$0xff]
    %v55 = vld [vmem:[#allocation3 + $0x28] sm:$0xff]
    %v56 = vld [vmem:[#allocation6] sm:$0xff]
    %v57 = vld [vmem:[#allocation6 + $0x8] sm:$0xff]
    %v58 = vld [vmem:[#allocation6 + $0x10] sm:$0xff]
    %v59 = vld [vmem:[#allocation6 + $0x18] sm:$0xff]
    %v60 = vld [vmem:[#allocation6 + $0x20] sm:$0xff]
    %v61 = vld [vmem:[#allocation6 + $0x28] sm:$0xff]
    %v62 = vsub.f32 %v50, %v56
    %v63 = vsub.f32 %v51, %v57
    %v64 = vsub.f32 %v52, %v58
    %v65 = vsub.f32 %v53, %v59
    %v66 = vsub.f32 %v54, %v60
    %v67 = vsub.f32 %v55, %v61
    %v68 = vmul.f32 %v62, %v62
    %v69 = vmul.f32 %v63, %v63
    %v70 = vmul.f32 %v64, %v64
    %v71 = vmul.f32 %v65, %v65
    %v72 = vmul.f32 %v66, %v66
    %v73 = vmul.f32 %v67, %v67
    %p74 = scmp.lt.s32.totalorder 0, 0
    // Predicated region
    $region22: #{tpu_custom_call.1} parent=1 // pred_check
      %p75 = pneg %p74
    $region23: #{tpu_custom_call.1} parent=1 // pred_check_branch
      %77 = sbr.rel (%p75) target = $region25
    $region24: #{tpu_custom_call.1} parent=1 // pred_region
      %v78 = vld [vmem:[#allocation2] sm:$0xff]
      %v79 = vld [vmem:[#allocation2 + $0x8] sm:$0xff]
      %v80 = vld [vmem:[#allocation2 + $0x10] sm:$0xff]
      %v81 = vld [vmem:[#allocation2 + $0x18] sm:$0xff]
      %v82 = vld [vmem:[#allocation2 + $0x20] sm:$0xff]
      %v83 = vld [vmem:[#allocation2 + $0x28] sm:$0xff]
      %v84 = vadd.f32 %v78, %v68
      %v85 = vadd.f32 %v79, %v69
      %v86 = vadd.f32 %v80, %v70
      %v87 = vadd.f32 %v81, %v71
      %v88 = vadd.f32 %v82, %v72
      %v89 = vadd.f32 %v83, %v73
      %90 = vst [vmem:[#allocation2] sm:$0xff] %v84
      %91 = vst [vmem:[#allocation2 + $0x8] sm:$0xff] %v85
      %92 = vst [vmem:[#allocation2 + $0x10] sm:$0xff] %v86
      %93 = vst [vmem:[#allocation2 + $0x18] sm:$0xff] %v87
      %94 = vst [vmem:[#allocation2 + $0x20] sm:$0xff] %v88
      %95 = vst [vmem:[#allocation2 + $0x28] sm:$0xff] %v89
    $region25: #{tpu_custom_call.1} parent=1 // pred_fallthru
      _
    // Predicated region
    $region26: #{tpu_custom_call.1} parent=1 // pred_check
      %p96 = pneg %p40
    $region27: #{tpu_custom_call.1} parent=1 // pred_check_branch
      %98 = sbr.rel (%p96) target = $region29
    $region28: #{tpu_custom_call.1} parent=1 // pred_region
      %v99 = vlaneseq
      %v100 = vshrl.u32 %v99, 7
      %v101 = vadd.s32 %v100, 8
      %v102 = vadd.s32 %v100, 16
      %s103 = smul.u32 0, 24
      %v104 = vstv %s103
      %v105 = vadd.s32 %v100, %v104
      %v106 = vadd.s32 %v101, %v104
      %v107 = vadd.s32 %v102, %v104
      %vm108 = vcmp.lt.s32.totalorder %v105, 24
      %vm109 = vcmp.lt.s32.totalorder %v106, 24
      %vm110 = vcmp.lt.s32.totalorder %v107, 24
      %v111 = vld [vmem:[#allocation2] sm:$0xff]
      %v112 = vld [vmem:[#allocation2 + $0x8] sm:$0xff]
      %v113 = vld [vmem:[#allocation2 + $0x10] sm:$0xff]
      %v114 = vld [vmem:[#allocation2 + $0x18] sm:$0xff]
      %v115 = vld [vmem:[#allocation2 + $0x20] sm:$0xff]
      %v116 = vld [vmem:[#allocation2 + $0x28] sm:$0xff]
      %v117 = vsel %vm108, %v68, 0.0
      %v118 = vsel %vm108, %v69, 0.0
      %v119 = vsel %vm109, %v70, 0.0
      %v120 = vsel %vm109, %v71, 0.0
      %v121 = vsel %vm110, %v72, 0.0
      %v122 = vsel %vm110, %v73, 0.0
      %v123 = vadd.f32 %v111, %v117
      %v124 = vadd.f32 %v112, %v118
      %v125 = vadd.f32 %v113, %v119
      %v126 = vadd.f32 %v114, %v120
      %v127 = vadd.f32 %v115, %v121
      %v128 = vadd.f32 %v116, %v122
      %vm129 = vcmp.lt.s32.totalorder %v100, 0
      %v130 = vsub.s32 0, %v100
      %v131 = vsel %vm129, %v130, %v100
      %v132 = vshrl.u32 %v131, 2
      %v133 = vand.u32 %v131, 3
      %v134 = vsub.s32 0, %v133
      %v135 = vsel %vm129, %v134, %v133
      %vm136 = vcmp.lt.s32.totalorder %v101, 0
      %v137 = vsub.s32 0, %v101
      %v138 = vsel %vm136, %v137, %v101
      %v139 = vshrl.u32 %v138, 2
      %v140 = vand.u32 %v138, 3
      %v141 = vsub.s32 0, %v140
      %v142 = vsel %vm136, %v141, %v140
      %vm143 = vcmp.lt.s32.totalorder %v102, 0
      %v144 = vsub.s32 0, %v102
      %v145 = vsel %vm143, %v144, %v102
      %v146 = vshrl.u32 %v145, 2
      %v147 = vand.u32 %v145, 3
      %v148 = vsub.s32 0, %v147
      %v149 = vsel %vm143, %v148, %v147
      %vm150 = vcmp.ne.s32.totalorder %v135, 0
      %vm151 = vcmp.ne.s32.totalorder %v142, 0
      %vm152 = vcmp.ne.s32.totalorder %v149, 0
      %vm153 = vcmp.lt.s32.totalorder %v135, 0
      %vm154 = vcmp.lt.s32.totalorder %v142, 0
      %vm155 = vcmp.lt.s32.totalorder %v149, 0
      %vm156 = vmand %vm153, %vm150
      %vm157 = vmand %vm154, %vm151
      %vm158 = vmand %vm155, %vm152
      %v159 = vadd.s32 %v135, 4
      %v160 = vadd.s32 %v142, 4
      %v161 = vadd.s32 %v149, 4
      %v162 = vsel %vm156, %v159, %v135
      %v163 = vsel %vm157, %v160, %v142
      %v164 = vsel %vm158, %v161, %v149
      %vm165 = vcmp.lt.s32.totalorder %v162, 2
      %vm166 = vcmp.lt.s32.totalorder %v163, 2
      %vm167 = vcmp.lt.s32.totalorder %v164, 2
      %v168 = vsel %vm165, %v123, 0.0
      %v169 = vsel %vm165, %v124, 0.0
      %v170 = vsel %vm166, %v125, 0.0
      %v171 = vsel %vm166, %v126, 0.0
      %v172 = vsel %vm167, %v127, 0.0
      %v173 = vsel %vm167, %v128, 0.0
      %v174 = vadd.f32 %v168, %v169
      %v175 = vadd.f32 %v174, %v170
      %v176 = vadd.f32 %v175, %v171
      %v177 = vadd.f32 %v176, %v172
      %v178 = vadd.f32 %v177, %v173
      %179 = vadd.xlane.f32.xlu0 %v178
      %v180 = vpop.xlane.xlu0 %179
      %v181 = vrot.slane %v180, 4
      %v182 = vadd.f32 %v180, %v181
      %v183 = vrot.slane %v182, 2
      %v184 = vadd.f32 %v182, %v183
      %v185 = vrot.slane %v184, 1
      %v186 = vadd.f32 %v184, %v185
      %s187 = vtos %v186
      %v188 = vadd.f32 %v123, %v124
      %v189 = vadd.f32 %v188, %v125
      %v190 = vadd.f32 %v189, %v126
      %v191 = vadd.f32 %v190, %v127
      %v192 = vadd.f32 %v191, %v128
      %193 = vadd.xlane.f32.xlu0 %v192
      %v194 = vpop.xlane.xlu0 %193
      %v195 = vrot.slane %v194, 4
      %v196 = vadd.f32 %v194, %v195
      %v197 = vrot.slane %v196, 2
      %v198 = vadd.f32 %v196, %v197
      %v199 = vrot.slane %v198, 1
      %v200 = vadd.f32 %v198, %v199
      %s201 = vtos %v200
      %s202 = scalar_lea.smem [#allocation8], 0
      %203 = sst [smem:[%s202]] %s187
      %s204 = ssub.f32 %s201, %s187
      %s205 = scalar_lea.smem [#allocation8], 1
      %206 = sst [smem:[%s205]] %s204
    $region29: #{tpu_custom_call.1} parent=1 // pred_fallthru
      _
    // Predicated region
    $region30: #{tpu_custom_call.1} parent=1 // pred_check
      _
    $region31: #{tpu_custom_call.1} parent=1 // pred_check_branch
      %208 = sbr.rel (0) target = $region33
    $region32: #{tpu_custom_call.1} parent=1 // pred_region
      %s210 = ssub.s32 16, 16
      %211 = vsyncadd [#allocation5], %s210
      %214 = dma.smem_to_hbm [#allocation8], 16, %s2, [#allocation5]
    $region33: #{tpu_custom_call.1} parent=1 // pred_fallthru
      _
    // Predicated region
    $region34: #{tpu_custom_call.1} parent=1 // pred_check
      _
    $region35: #{tpu_custom_call.1} parent=1 // pred_check_branch
      %216 = sbr.rel (0) target = $region37
    $region36: #{tpu_custom_call.1} parent=1 // pred_region
      %217 = dma.done [#allocation5], 16
    $region37: #{tpu_custom_call.1} parent=1 // pred_fallthru
      _
    %218 = sfence
    %219 = vsyncpa [#allocation4], 1
    %220 = vsyncpa [#allocation7], 1
    %221 = vsyncpa [#allocation5], 1

</llo_original>
